<compile_context>
chip_gen: v5e
topology: v5e:2x2
jax: 0.10.0
libtpu: 0.0.40
codegen_flags: <defaults>
</compile_context>

<pallas_src>
import functools

import jax
import jax.numpy as jnp
from jax.experimental import pallas as pl
from jax.experimental.pallas import tpu as pltpu

_LANE = 128
_SUBLANE = 8
_VMEM_RESIDENT_BUDGET = 48 * 1024 * 1024  # conservative for v7x (64 MiB / TC)


def _round_up(x: int, m: int) -> int:
    return ((x + m - 1) // m) * m


def _embed_kernel(g_ref, table_ref, out_ref, row_buf,
                  *, bt: int, n_feat: int, band_pad: int, band_starts):
    """One batch tile: gather all features from the VMEM-resident table.

    g_ref     : SMEM (n_feat, B_pad) int32  globalized row indices (prefetched)
    table_ref : VMEM (c_pad, band_pad) f32  row-packed tables (resident: its
                BlockSpec index_map is constant, so it is DMAed only once)
    out_ref   : VMEM (bt, E_pad) f32        packed output slab for this tile
    row_buf   : VMEM (bt, band_pad) f32     per-feature gather landing buffer
    """
    b = pl.program_id(0)
    base = b * bt

    # Zero the whole output block once (covers lane padding beyond sum(emb)).
    out_ref[...] = jnp.zeros_like(out_ref)

    def gather_feature(f):
        # Gather this feature's bt rows from the resident table into row_buf.
        if bt <= 32:
            # Static unroll: static sublane store index, dynamic row load.
            for j in range(bt):
                row = g_ref[f, base + j]
                row_buf[pl.ds(j, 1), :] = table_ref[pl.ds(row, 1), :]
        else:
            def body(j, carry):
                row = g_ref[f, base + j]
                row_buf[pl.ds(j, 1), :] = table_ref[pl.ds(row, 1), :]
                return carry
            jax.lax.fori_loop(0, bt, body, 0, unroll=8)

    for f in range(n_feat):            # n_feat is small and static
        gather_feature(f)
        s = band_starts[f]             # static, multiple of 128
        # The gathered rows already carry this feature's values at the correct
        # in-band lane offset (zeros elsewhere), so a lane-aligned block add
        # packs the column band in place.  Bands are disjoint -> add == concat.
        out_ref[:, s:s + band_pad] = out_ref[:, s:s + band_pad] + row_buf[...]


class CatEmbedderPallas:
    """JAX/Pallas port of CatEmbedder (inference forward)."""

    def __init__(self, cat_dims, emb_dropout=0.1, emb_ratio=3, max_emb_size=50,
                 key=jax.random.PRNGKey(0)):
        self.cat_dims = [int(x) for x in cat_dims]
        self.emb_dims = [
            (int(x), int(min(max_emb_size, max(1, (x + 1) // emb_ratio))))
            for x in cat_dims
        ]
        self.no_of_embs = sum(y for _, y in self.emb_dims)
        assert self.no_of_embs != 0, "The input is empty."
        self.n_feat = len(self.emb_dims)

        # Deterministic parameter init (nn.Embedding default: N(0, 1)).
        keys = jax.random.split(key, self.n_feat)
        self.tables = [
            jax.random.normal(k, (x, y), dtype=jnp.float32)
            for k, (x, y) in zip(keys, self.emb_dims)
        ]

        # Row offset of each feature's band in the packed table.
        self.cat_offsets = []
        off = 0
        for x, _ in self.emb_dims:
            self.cat_offsets.append(off)
            off += x
        self.total_cats = off

        # Output column offset of each feature.
        self.col_offsets = []
        coff = 0
        for _, y in self.emb_dims:
            self.col_offsets.append(coff)
            coff += y

        max_w = max(y for _, y in self.emb_dims)
        assert max_w <= _LANE, "TODO(synk): support embedding dims > 128 lanes"

        # Does any feature's column band cross a 128-lane output block? If so,
        # the per-row band needs 2 lane blocks; otherwise 1.
        crosses = any((c % _LANE) + w > _LANE
                      for c, (_, w) in zip(self.col_offsets, self.emb_dims))
        self.band_pad = 2 * _LANE if crosses else _LANE
        # Aligned output block each feature's band lives in (multiple of 128).
        self.band_starts = tuple((c // _LANE) * _LANE for c in self.col_offsets)

        # Output lane padding for the kernel slab.
        self.e_pad = max(_round_up(self.no_of_embs, _LANE),
                         max(self.band_starts) + self.band_pad)

        # Row-packed table: feature i occupies rows [off_i, off_i + cat_i) and
        # lanes [col_i % 128, col_i % 128 + emb_i) of its band.  Table bytes
        # scale with sum(cat_i) * band_pad (<= 256 lanes), not sum(cat)*sum(emb).
        # TODO(synk): store in bfloat16 on v6e/v7x to halve VMEM footprint and
        # gather read bytes (cast after gather); kept f32 to match nn.Embedding.
        self.c_pad = _round_up(self.total_cats, _SUBLANE)
        packed = jnp.zeros((self.c_pad, self.band_pad), jnp.float32)
        for t, ro, co, (x, y) in zip(self.tables, self.cat_offsets,
                                     self.col_offsets, self.emb_dims):
            lane0 = co % _LANE
            packed = packed.at[ro:ro + x, lane0:lane0 + y].set(t)
        self.packed_table = packed

        # VMEM residency budgeting (per-TC, conservative for v7x's 64 MiB).
        self._table_bytes = self.c_pad * self.band_pad * 4
        assert self._table_bytes <= _VMEM_RESIDENT_BUDGET, (
            "TODO(synk): table too large for VMEM residency; add the "
            "double-buffered HBM-DMA gather fallback path")

    def get_out_shape(self) -> int:
        return self.no_of_embs

    def __call__(self, inp):
        idx = inp["cat"].astype(jnp.int32)              # (B, n_feat)
        batch, n_feat = idx.shape
        assert n_feat == self.n_feat

        # Clamp out-of-range categories (nn.Embedding would raise; clamping is
        # the safe in-kernel behavior).
        maxes = jnp.asarray([d - 1 for d in self.cat_dims], jnp.int32)
        idx = jnp.clip(idx, 0, maxes[None, :])

        # Globalize into packed-table rows; layout (n_feat, B_pad) keeps the
        # long axis last for SMEM scalar-prefetch padding.
        # TODO(synk): for very large batches switch the indices to a tiled
        # SMEM-space input (BlockSpec per batch tile) to bound SMEM usage.
        offs = jnp.asarray(self.cat_offsets, jnp.int32)
        g = idx.T + offs[:, None]                       # (n_feat, B)

        bt = min(256, _round_up(batch, _SUBLANE))       # batch tile
        b_pad = _round_up(batch, bt)
        if b_pad != batch:
            # Padded rows gather each feature's row 0; sliced off below.
            pad = jnp.tile(offs[:, None], (1, b_pad - batch))
            g = jnp.concatenate([g, pad], axis=1)
        n_bt = b_pad // bt

        out_block_bytes = bt * self.e_pad * 4
        row_buf_bytes = bt * self.band_pad * 4
        need = (2 * self._table_bytes + 2 * out_block_bytes + row_buf_bytes
                + (2 << 20))
        vmem_limit = int(min(max(need, 32 << 20), _VMEM_RESIDENT_BUDGET))

        kernel = functools.partial(
            _embed_kernel, bt=bt, n_feat=self.n_feat,
            band_pad=self.band_pad, band_starts=self.band_starts)

        out_padded = pl.pallas_call(
            kernel,
            out_shape=jax.ShapeDtypeStruct((b_pad, self.e_pad), jnp.float32),
            grid_spec=pltpu.PrefetchScalarGridSpec(
                num_scalar_prefetch=1,                  # g -> SMEM
                grid=(n_bt,),
                in_specs=[
                    # Constant block index across the grid -> table is DMAed
                    # HBM->VMEM once and stays resident.
                    pl.BlockSpec((self.c_pad, self.band_pad),
                                 lambda b, g: (0, 0)),
                ],
                out_specs=pl.BlockSpec((bt, self.e_pad), lambda b, g: (b, 0)),
                scratch_shapes=[
                    pltpu.VMEM((bt, self.band_pad), jnp.float32),  # row_buf
                ],
            ),
            compiler_params=pltpu.CompilerParams(
                dimension_semantics=("parallel",),      # v7x: 2-TC batch split
                vmem_limit_bytes=vmem_limit,
            ),
            cost_estimate=pl.CostEstimate(
                flops=self.n_feat * b_pad * self.band_pad,
                transcendentals=0,
                bytes_accessed=self._table_bytes
                               + self.n_feat * b_pad * 4
                               + b_pad * self.e_pad * 4,
            ),
        )(g, self.packed_table)                         # (b_pad, e_pad)

        out = out_padded[:batch, :self.no_of_embs]      # single cheap slice
        # TODO(synk): training-mode Dropout(emb_dropout) would use
        # pltpu.prng_seed / pltpu.prng_random_bits; eval mode is identity.
        return out


def _reference_forward(embedder: CatEmbedderPallas, idx: jnp.ndarray):
    """Pure-JAX reference (jnp.take per table + concat), for validation."""
    maxes = jnp.asarray([d - 1 for d in embedder.cat_dims], jnp.int32)
    idxc = jnp.clip(idx.astype(jnp.int32), 0, maxes[None, :])
    outs = [jnp.take(t, idxc[:, i], axis=0)
            for i, t in enumerate(embedder.tables)]
    return jnp.concatenate(outs, axis=1)


if __name__ == "__main__":
    key = jax.random.PRNGKey(0)
    k_params, k_idx = jax.random.split(key)

    cat_dims = [7, 11, 23, 301]          # 4 categorical features
    embedder = CatEmbedderPallas(cat_dims, emb_dropout=0.1, emb_ratio=3,
                                 max_emb_size=50, key=k_params)
    # emb dims -> [2, 4, 8, 50]; output width = 64

    batch = 8
    idx_keys = jax.random.split(k_idx, len(cat_dims))
    idx_cols = [jax.random.randint(kk, (batch,), 0, d, dtype=jnp.int32)
                for kk, d in zip(idx_keys, cat_dims)]
    cat = jnp.stack(idx_cols, axis=1)    # (batch, n_features) int32

    out = embedder({"cat": cat})
    out = jax.block_until_ready(out)

    assert out.shape == (batch, embedder.get_out_shape())
    ref = _reference_forward(embedder, cat)
    assert jnp.allclose(out, ref, atol=1e-6, rtol=1e-6), "mismatch vs reference"

    print("KERNEL_OK")
</pallas_src>

<mosaic_0001>
module attributes {stable_mosaic.version = 11 : i64} {
  func.func @_embed_kernel(%arg0: i32, %arg1: memref<4x8xi32, #tpu.memory_space<smem>>, %arg2: memref<344x128xf32, #tpu.memory_space<vmem>>, %arg3: memref<8x128xf32, #tpu.memory_space<vmem>>, %arg4: memref<8x128xf32, #tpu.memory_space<vmem>>) attributes {dimension_semantics = [#tpu.dimension_semantics<parallel>], iteration_bounds = array<i64: 1>, scalar_prefetch = 1 : i64, scratch_operands = 1 : i64, tpu.core_type = #tpu.core_type<tc>, window_params = [{pipeline_mode = #tpu.pipeline_mode<synchronous>, transform_indices = @transform_0, window_bounds = array<i64: 344, 128>}, {transform_indices = @transform_1, window_bounds = array<i64: 8, 128>}]} {
    %c8_i32 = arith.constant 8 : i32
    %0 = arith.muli %arg0, %c8_i32 : i32
    %cst = arith.constant 0.000000e+00 : f32
    %1 = vector.broadcast %cst : f32 to vector<8x128xf32>
    %c0 = arith.constant 0 : index
    %c0_0 = arith.constant 0 : index
    %2 = vector.load %arg3[%c0, %c0_0] : memref<8x128xf32, #tpu.memory_space<vmem>>, vector<8x128xf32>
    tpu.vector_store %arg3[%c0, %c0_0], %1 {strides = array<i32>} : memref<8x128xf32, #tpu.memory_space<vmem>>, vector<8x128xf32>,
    %c0_i32 = arith.constant 0 : i32
    %3 = arith.addi %0, %c0_i32 : i32
    %c0_1 = arith.constant 0 : index
    %4 = arith.index_cast %3 : i32 to index
    %5 = memref.load %arg1[%c0_1, %4] : memref<4x8xi32, #tpu.memory_space<smem>>
    %6 = arith.index_cast %5 : i32 to index
    %c0_2 = arith.constant 0 : index
    %7 = vector.load %arg2[%6, %c0_2] : memref<344x128xf32, #tpu.memory_space<vmem>>, vector<1x128xf32>
    %c0_3 = arith.constant 0 : index
    %c0_4 = arith.constant 0 : index
    %8 = vector.load %arg4[%c0_3, %c0_4] : memref<8x128xf32, #tpu.memory_space<vmem>>, vector<1x128xf32>
    tpu.vector_store %arg4[%c0_3, %c0_4], %7 {strides = array<i32>} : memref<8x128xf32, #tpu.memory_space<vmem>>, vector<1x128xf32>,
    %c1_i32 = arith.constant 1 : i32
    %9 = arith.addi %0, %c1_i32 : i32
    %c0_5 = arith.constant 0 : index
    %10 = arith.index_cast %9 : i32 to index
    %11 = memref.load %arg1[%c0_5, %10] : memref<4x8xi32, #tpu.memory_space<smem>>
    %12 = arith.index_cast %11 : i32 to index
    %c0_6 = arith.constant 0 : index
    %13 = vector.load %arg2[%12, %c0_6] : memref<344x128xf32, #tpu.memory_space<vmem>>, vector<1x128xf32>
    %c1 = arith.constant 1 : index
    %c0_7 = arith.constant 0 : index
    %14 = vector.load %arg4[%c1, %c0_7] : memref<8x128xf32, #tpu.memory_space<vmem>>, vector<1x128xf32>
    tpu.vector_store %arg4[%c1, %c0_7], %13 {strides = array<i32>} : memref<8x128xf32, #tpu.memory_space<vmem>>, vector<1x128xf32>,
    %c2_i32 = arith.constant 2 : i32
    %15 = arith.addi %0, %c2_i32 : i32
    %c0_8 = arith.constant 0 : index
    %16 = arith.index_cast %15 : i32 to index
    %17 = memref.load %arg1[%c0_8, %16] : memref<4x8xi32, #tpu.memory_space<smem>>
    %18 = arith.index_cast %17 : i32 to index
    %c0_9 = arith.constant 0 : index
    %19 = vector.load %arg2[%18, %c0_9] : memref<344x128xf32, #tpu.memory_space<vmem>>, vector<1x128xf32>
    %c2 = arith.constant 2 : index
    %c0_10 = arith.constant 0 : index
    %20 = vector.load %arg4[%c2, %c0_10] : memref<8x128xf32, #tpu.memory_space<vmem>>, vector<1x128xf32>
    tpu.vector_store %arg4[%c2, %c0_10], %19 {strides = array<i32>} : memref<8x128xf32, #tpu.memory_space<vmem>>, vector<1x128xf32>,
    %c3_i32 = arith.constant 3 : i32
    %21 = arith.addi %0, %c3_i32 : i32
    %c0_11 = arith.constant 0 : index
    %22 = arith.index_cast %21 : i32 to index
    %23 = memref.load %arg1[%c0_11, %22] : memref<4x8xi32, #tpu.memory_space<smem>>
    %24 = arith.index_cast %23 : i32 to index
    %c0_12 = arith.constant 0 : index
    %25 = vector.load %arg2[%24, %c0_12] : memref<344x128xf32, #tpu.memory_space<vmem>>, vector<1x128xf32>
    %c3 = arith.constant 3 : index
    %c0_13 = arith.constant 0 : index
    %26 = vector.load %arg4[%c3, %c0_13] : memref<8x128xf32, #tpu.memory_space<vmem>>, vector<1x128xf32>
    tpu.vector_store %arg4[%c3, %c0_13], %25 {strides = array<i32>} : memref<8x128xf32, #tpu.memory_space<vmem>>, vector<1x128xf32>,
    %c4_i32 = arith.constant 4 : i32
    %27 = arith.addi %0, %c4_i32 : i32
    %c0_14 = arith.constant 0 : index
    %28 = arith.index_cast %27 : i32 to index
    %29 = memref.load %arg1[%c0_14, %28] : memref<4x8xi32, #tpu.memory_space<smem>>
    %30 = arith.index_cast %29 : i32 to index
    %c0_15 = arith.constant 0 : index
    %31 = vector.load %arg2[%30, %c0_15] : memref<344x128xf32, #tpu.memory_space<vmem>>, vector<1x128xf32>
    %c4 = arith.constant 4 : index
    %c0_16 = arith.constant 0 : index
    %32 = vector.load %arg4[%c4, %c0_16] : memref<8x128xf32, #tpu.memory_space<vmem>>, vector<1x128xf32>
    tpu.vector_store %arg4[%c4, %c0_16], %31 {strides = array<i32>} : memref<8x128xf32, #tpu.memory_space<vmem>>, vector<1x128xf32>,
    %c5_i32 = arith.constant 5 : i32
    %33 = arith.addi %0, %c5_i32 : i32
    %c0_17 = arith.constant 0 : index
    %34 = arith.index_cast %33 : i32 to index
    %35 = memref.load %arg1[%c0_17, %34] : memref<4x8xi32, #tpu.memory_space<smem>>
    %36 = arith.index_cast %35 : i32 to index
    %c0_18 = arith.constant 0 : index
    %37 = vector.load %arg2[%36, %c0_18] : memref<344x128xf32, #tpu.memory_space<vmem>>, vector<1x128xf32>
    %c5 = arith.constant 5 : index
    %c0_19 = arith.constant 0 : index
    %38 = vector.load %arg4[%c5, %c0_19] : memref<8x128xf32, #tpu.memory_space<vmem>>, vector<1x128xf32>
    tpu.vector_store %arg4[%c5, %c0_19], %37 {strides = array<i32>} : memref<8x128xf32, #tpu.memory_space<vmem>>, vector<1x128xf32>,
    %c6_i32 = arith.constant 6 : i32
    %39 = arith.addi %0, %c6_i32 : i32
    %c0_20 = arith.constant 0 : index
    %40 = arith.index_cast %39 : i32 to index
    %41 = memref.load %arg1[%c0_20, %40] : memref<4x8xi32, #tpu.memory_space<smem>>
    %42 = arith.index_cast %41 : i32 to index
    %c0_21 = arith.constant 0 : index
    %43 = vector.load %arg2[%42, %c0_21] : memref<344x128xf32, #tpu.memory_space<vmem>>, vector<1x128xf32>
    %c6 = arith.constant 6 : index
    %c0_22 = arith.constant 0 : index
    %44 = vector.load %arg4[%c6, %c0_22] : memref<8x128xf32, #tpu.memory_space<vmem>>, vector<1x128xf32>
    tpu.vector_store %arg4[%c6, %c0_22], %43 {strides = array<i32>} : memref<8x128xf32, #tpu.memory_space<vmem>>, vector<1x128xf32>,
    %c7_i32 = arith.constant 7 : i32
    %45 = arith.addi %0, %c7_i32 : i32
    %c0_23 = arith.constant 0 : index
    %46 = arith.index_cast %45 : i32 to index
    %47 = memref.load %arg1[%c0_23, %46] : memref<4x8xi32, #tpu.memory_space<smem>>
    %48 = arith.index_cast %47 : i32 to index
    %c0_24 = arith.constant 0 : index
    %49 = vector.load %arg2[%48, %c0_24] : memref<344x128xf32, #tpu.memory_space<vmem>>, vector<1x128xf32>
    %c7 = arith.constant 7 : index
    %c0_25 = arith.constant 0 : index
    %50 = vector.load %arg4[%c7, %c0_25] : memref<8x128xf32, #tpu.memory_space<vmem>>, vector<1x128xf32>
    tpu.vector_store %arg4[%c7, %c0_25], %49 {strides = array<i32>} : memref<8x128xf32, #tpu.memory_space<vmem>>, vector<1x128xf32>,
    %c0_26 = arith.constant 0 : index
    %c0_27 = arith.constant 0 : index
    %51 = vector.load %arg3[%c0_26, %c0_27] : memref<8x128xf32, #tpu.memory_space<vmem>>, vector<8x128xf32>
    %c0_28 = arith.constant 0 : index
    %c0_29 = arith.constant 0 : index
    %52 = vector.load %arg4[%c0_28, %c0_29] : memref<8x128xf32, #tpu.memory_space<vmem>>, vector<8x128xf32>
    %53 = arith.addf %51, %52 : vector<8x128xf32>
    %c0_30 = arith.constant 0 : index
    %c0_31 = arith.constant 0 : index
    %54 = vector.load %arg3[%c0_30, %c0_31] : memref<8x128xf32, #tpu.memory_space<vmem>>, vector<8x128xf32>
    tpu.vector_store %arg3[%c0_30, %c0_31], %53 {strides = array<i32>} : memref<8x128xf32, #tpu.memory_space<vmem>>, vector<8x128xf32>,
    %c0_i32_32 = arith.constant 0 : i32
    %55 = arith.addi %0, %c0_i32_32 : i32
    %c1_33 = arith.constant 1 : index
    %56 = arith.index_cast %55 : i32 to index
    %57 = memref.load %arg1[%c1_33, %56] : memref<4x8xi32, #tpu.memory_space<smem>>
    %58 = arith.index_cast %57 : i32 to index
    %c0_34 = arith.constant 0 : index
    %59 = vector.load %arg2[%58, %c0_34] : memref<344x128xf32, #tpu.memory_space<vmem>>, vector<1x128xf32>
    %c0_35 = arith.constant 0 : index
    %c0_36 = arith.constant 0 : index
    %60 = vector.load %arg4[%c0_35, %c0_36] : memref<8x128xf32, #tpu.memory_space<vmem>>, vector<1x128xf32>
    tpu.vector_store %arg4[%c0_35, %c0_36], %59 {strides = array<i32>} : memref<8x128xf32, #tpu.memory_space<vmem>>, vector<1x128xf32>,
    %c1_i32_37 = arith.constant 1 : i32
    %61 = arith.addi %0, %c1_i32_37 : i32
    %c1_38 = arith.constant 1 : index
    %62 = arith.index_cast %61 : i32 to index
    %63 = memref.load %arg1[%c1_38, %62] : memref<4x8xi32, #tpu.memory_space<smem>>
    %64 = arith.index_cast %63 : i32 to index
    %c0_39 = arith.constant 0 : index
    %65 = vector.load %arg2[%64, %c0_39] : memref<344x128xf32, #tpu.memory_space<vmem>>, vector<1x128xf32>
    %c1_40 = arith.constant 1 : index
    %c0_41 = arith.constant 0 : index
    %66 = vector.load %arg4[%c1_40, %c0_41] : memref<8x128xf32, #tpu.memory_space<vmem>>, vector<1x128xf32>
    tpu.vector_store %arg4[%c1_40, %c0_41], %65 {strides = array<i32>} : memref<8x128xf32, #tpu.memory_space<vmem>>, vector<1x128xf32>,
    %c2_i32_42 = arith.constant 2 : i32
    %67 = arith.addi %0, %c2_i32_42 : i32
    %c1_43 = arith.constant 1 : index
    %68 = arith.index_cast %67 : i32 to index
    %69 = memref.load %arg1[%c1_43, %68] : memref<4x8xi32, #tpu.memory_space<smem>>
    %70 = arith.index_cast %69 : i32 to index
    %c0_44 = arith.constant 0 : index
    %71 = vector.load %arg2[%70, %c0_44] : memref<344x128xf32, #tpu.memory_space<vmem>>, vector<1x128xf32>
    %c2_45 = arith.constant 2 : index
    %c0_46 = arith.constant 0 : index
    %72 = vector.load %arg4[%c2_45, %c0_46] : memref<8x128xf32, #tpu.memory_space<vmem>>, vector<1x128xf32>
    tpu.vector_store %arg4[%c2_45, %c0_46], %71 {strides = array<i32>} : memref<8x128xf32, #tpu.memory_space<vmem>>, vector<1x128xf32>,
    %c3_i32_47 = arith.constant 3 : i32
    %73 = arith.addi %0, %c3_i32_47 : i32
    %c1_48 = arith.constant 1 : index
    %74 = arith.index_cast %73 : i32 to index
    %75 = memref.load %arg1[%c1_48, %74] : memref<4x8xi32, #tpu.memory_space<smem>>
    %76 = arith.index_cast %75 : i32 to index
    %c0_49 = arith.constant 0 : index
    %77 = vector.load %arg2[%76, %c0_49] : memref<344x128xf32, #tpu.memory_space<vmem>>, vector<1x128xf32>
    %c3_50 = arith.constant 3 : index
    %c0_51 = arith.constant 0 : index
    %78 = vector.load %arg4[%c3_50, %c0_51] : memref<8x128xf32, #tpu.memory_space<vmem>>, vector<1x128xf32>
    tpu.vector_store %arg4[%c3_50, %c0_51], %77 {strides = array<i32>} : memref<8x128xf32, #tpu.memory_space<vmem>>, vector<1x128xf32>,
    %c4_i32_52 = arith.constant 4 : i32
    %79 = arith.addi %0, %c4_i32_52 : i32
    %c1_53 = arith.constant 1 : index
    %80 = arith.index_cast %79 : i32 to index
    %81 = memref.load %arg1[%c1_53, %80] : memref<4x8xi32, #tpu.memory_space<smem>>
    %82 = arith.index_cast %81 : i32 to index
    %c0_54 = arith.constant 0 : index
    %83 = vector.load %arg2[%82, %c0_54] : memref<344x128xf32, #tpu.memory_space<vmem>>, vector<1x128xf32>
    %c4_55 = arith.constant 4 : index
    %c0_56 = arith.constant 0 : index
    %84 = vector.load %arg4[%c4_55, %c0_56] : memref<8x128xf32, #tpu.memory_space<vmem>>, vector<1x128xf32>
    tpu.vector_store %arg4[%c4_55, %c0_56], %83 {strides = array<i32>} : memref<8x128xf32, #tpu.memory_space<vmem>>, vector<1x128xf32>,
    %c5_i32_57 = arith.constant 5 : i32
    %85 = arith.addi %0, %c5_i32_57 : i32
    %c1_58 = arith.constant 1 : index
    %86 = arith.index_cast %85 : i32 to index
    %87 = memref.load %arg1[%c1_58, %86] : memref<4x8xi32, #tpu.memory_space<smem>>
    %88 = arith.index_cast %87 : i32 to index
    %c0_59 = arith.constant 0 : index
    %89 = vector.load %arg2[%88, %c0_59] : memref<344x128xf32, #tpu.memory_space<vmem>>, vector<1x128xf32>
    %c5_60 = arith.constant 5 : index
    %c0_61 = arith.constant 0 : index
    %90 = vector.load %arg4[%c5_60, %c0_61] : memref<8x128xf32, #tpu.memory_space<vmem>>, vector<1x128xf32>
    tpu.vector_store %arg4[%c5_60, %c0_61], %89 {strides = array<i32>} : memref<8x128xf32, #tpu.memory_space<vmem>>, vector<1x128xf32>,
    %c6_i32_62 = arith.constant 6 : i32
    %91 = arith.addi %0, %c6_i32_62 : i32
    %c1_63 = arith.constant 1 : index
    %92 = arith.index_cast %91 : i32 to index
    %93 = memref.load %arg1[%c1_63, %92] : memref<4x8xi32, #tpu.memory_space<smem>>
    %94 = arith.index_cast %93 : i32 to index
    %c0_64 = arith.constant 0 : index
    %95 = vector.load %arg2[%94, %c0_64] : memref<344x128xf32, #tpu.memory_space<vmem>>, vector<1x128xf32>
    %c6_65 = arith.constant 6 : index
    %c0_66 = arith.constant 0 : index
    %96 = vector.load %arg4[%c6_65, %c0_66] : memref<8x128xf32, #tpu.memory_space<vmem>>, vector<1x128xf32>
    tpu.vector_store %arg4[%c6_65, %c0_66], %95 {strides = array<i32>} : memref<8x128xf32, #tpu.memory_space<vmem>>, vector<1x128xf32>,
    %c7_i32_67 = arith.constant 7 : i32
    %97 = arith.addi %0, %c7_i32_67 : i32
    %c1_68 = arith.constant 1 : index
    %98 = arith.index_cast %97 : i32 to index
    %99 = memref.load %arg1[%c1_68, %98] : memref<4x8xi32, #tpu.memory_space<smem>>
    %100 = arith.index_cast %99 : i32 to index
    %c0_69 = arith.constant 0 : index
    %101 = vector.load %arg2[%100, %c0_69] : memref<344x128xf32, #tpu.memory_space<vmem>>, vector<1x128xf32>
    %c7_70 = arith.constant 7 : index
    %c0_71 = arith.constant 0 : index
    %102 = vector.load %arg4[%c7_70, %c0_71] : memref<8x128xf32, #tpu.memory_space<vmem>>, vector<1x128xf32>
    tpu.vector_store %arg4[%c7_70, %c0_71], %101 {strides = array<i32>} : memref<8x128xf32, #tpu.memory_space<vmem>>, vector<1x128xf32>,
    %c0_72 = arith.constant 0 : index
    %c0_73 = arith.constant 0 : index
    %103 = vector.load %arg3[%c0_72, %c0_73] : memref<8x128xf32, #tpu.memory_space<vmem>>, vector<8x128xf32>
    %c0_74 = arith.constant 0 : index
    %c0_75 = arith.constant 0 : index
    %104 = vector.load %arg4[%c0_74, %c0_75] : memref<8x128xf32, #tpu.memory_space<vmem>>, vector<8x128xf32>
    %105 = arith.addf %103, %104 : vector<8x128xf32>
    %c0_76 = arith.constant 0 : index
    %c0_77 = arith.constant 0 : index
    %106 = vector.load %arg3[%c0_76, %c0_77] : memref<8x128xf32, #tpu.memory_space<vmem>>, vector<8x128xf32>
    tpu.vector_store %arg3[%c0_76, %c0_77], %105 {strides = array<i32>} : memref<8x128xf32, #tpu.memory_space<vmem>>, vector<8x128xf32>,
    %c0_i32_78 = arith.constant 0 : i32
    %107 = arith.addi %0, %c0_i32_78 : i32
    %c2_79 = arith.constant 2 : index
    %108 = arith.index_cast %107 : i32 to index
    %109 = memref.load %arg1[%c2_79, %108] : memref<4x8xi32, #tpu.memory_space<smem>>
    %110 = arith.index_cast %109 : i32 to index
    %c0_80 = arith.constant 0 : index
    %111 = vector.load %arg2[%110, %c0_80] : memref<344x128xf32, #tpu.memory_space<vmem>>, vector<1x128xf32>
    %c0_81 = arith.constant 0 : index
    %c0_82 = arith.constant 0 : index
    %112 = vector.load %arg4[%c0_81, %c0_82] : memref<8x128xf32, #tpu.memory_space<vmem>>, vector<1x128xf32>
    tpu.vector_store %arg4[%c0_81, %c0_82], %111 {strides = array<i32>} : memref<8x128xf32, #tpu.memory_space<vmem>>, vector<1x128xf32>,
    %c1_i32_83 = arith.constant 1 : i32
    %113 = arith.addi %0, %c1_i32_83 : i32
    %c2_84 = arith.constant 2 : index
    %114 = arith.index_cast %113 : i32 to index
    %115 = memref.load %arg1[%c2_84, %114] : memref<4x8xi32, #tpu.memory_space<smem>>
    %116 = arith.index_cast %115 : i32 to index
    %c0_85 = arith.constant 0 : index
    %117 = vector.load %arg2[%116, %c0_85] : memref<344x128xf32, #tpu.memory_space<vmem>>, vector<1x128xf32>
    %c1_86 = arith.constant 1 : index
    %c0_87 = arith.constant 0 : index
    %118 = vector.load %arg4[%c1_86, %c0_87] : memref<8x128xf32, #tpu.memory_space<vmem>>, vector<1x128xf32>
    tpu.vector_store %arg4[%c1_86, %c0_87], %117 {strides = array<i32>} : memref<8x128xf32, #tpu.memory_space<vmem>>, vector<1x128xf32>,
    %c2_i32_88 = arith.constant 2 : i32
    %119 = arith.addi %0, %c2_i32_88 : i32
    %c2_89 = arith.constant 2 : index
    %120 = arith.index_cast %119 : i32 to index
    %121 = memref.load %arg1[%c2_89, %120] : memref<4x8xi32, #tpu.memory_space<smem>>
    %122 = arith.index_cast %121 : i32 to index
    %c0_90 = arith.constant 0 : index
    %123 = vector.load %arg2[%122, %c0_90] : memref<344x128xf32, #tpu.memory_space<vmem>>, vector<1x128xf32>
    %c2_91 = arith.constant 2 : index
    %c0_92 = arith.constant 0 : index
    %124 = vector.load %arg4[%c2_91, %c0_92] : memref<8x128xf32, #tpu.memory_space<vmem>>, vector<1x128xf32>
    tpu.vector_store %arg4[%c2_91, %c0_92], %123 {strides = array<i32>} : memref<8x128xf32, #tpu.memory_space<vmem>>, vector<1x128xf32>,
    %c3_i32_93 = arith.constant 3 : i32
    %125 = arith.addi %0, %c3_i32_93 : i32
    %c2_94 = arith.constant 2 : index
    %126 = arith.index_cast %125 : i32 to index
    %127 = memref.load %arg1[%c2_94, %126] : memref<4x8xi32, #tpu.memory_space<smem>>
    %128 = arith.index_cast %127 : i32 to index
    %c0_95 = arith.constant 0 : index
    %129 = vector.load %arg2[%128, %c0_95] : memref<344x128xf32, #tpu.memory_space<vmem>>, vector<1x128xf32>
    %c3_96 = arith.constant 3 : index
    %c0_97 = arith.constant 0 : index
    %130 = vector.load %arg4[%c3_96, %c0_97] : memref<8x128xf32, #tpu.memory_space<vmem>>, vector<1x128xf32>
    tpu.vector_store %arg4[%c3_96, %c0_97], %129 {strides = array<i32>} : memref<8x128xf32, #tpu.memory_space<vmem>>, vector<1x128xf32>,
    %c4_i32_98 = arith.constant 4 : i32
    %131 = arith.addi %0, %c4_i32_98 : i32
    %c2_99 = arith.constant 2 : index
    %132 = arith.index_cast %131 : i32 to index
    %133 = memref.load %arg1[%c2_99, %132] : memref<4x8xi32, #tpu.memory_space<smem>>
    %134 = arith.index_cast %133 : i32 to index
    %c0_100 = arith.constant 0 : index
    %135 = vector.load %arg2[%134, %c0_100] : memref<344x128xf32, #tpu.memory_space<vmem>>, vector<1x128xf32>
    %c4_101 = arith.constant 4 : index
    %c0_102 = arith.constant 0 : index
    %136 = vector.load %arg4[%c4_101, %c0_102] : memref<8x128xf32, #tpu.memory_space<vmem>>, vector<1x128xf32>
    tpu.vector_store %arg4[%c4_101, %c0_102], %135 {strides = array<i32>} : memref<8x128xf32, #tpu.memory_space<vmem>>, vector<1x128xf32>,
    %c5_i32_103 = arith.constant 5 : i32
    %137 = arith.addi %0, %c5_i32_103 : i32
    %c2_104 = arith.constant 2 : index
    %138 = arith.index_cast %137 : i32 to index
    %139 = memref.load %arg1[%c2_104, %138] : memref<4x8xi32, #tpu.memory_space<smem>>
    %140 = arith.index_cast %139 : i32 to index
    %c0_105 = arith.constant 0 : index
    %141 = vector.load %arg2[%140, %c0_105] : memref<344x128xf32, #tpu.memory_space<vmem>>, vector<1x128xf32>
    %c5_106 = arith.constant 5 : index
    %c0_107 = arith.constant 0 : index
    %142 = vector.load %arg4[%c5_106, %c0_107] : memref<8x128xf32, #tpu.memory_space<vmem>>, vector<1x128xf32>
    tpu.vector_store %arg4[%c5_106, %c0_107], %141 {strides = array<i32>} : memref<8x128xf32, #tpu.memory_space<vmem>>, vector<1x128xf32>,
    %c6_i32_108 = arith.constant 6 : i32
    %143 = arith.addi %0, %c6_i32_108 : i32
    %c2_109 = arith.constant 2 : index
    %144 = arith.index_cast %143 : i32 to index
    %145 = memref.load %arg1[%c2_109, %144] : memref<4x8xi32, #tpu.memory_space<smem>>
    %146 = arith.index_cast %145 : i32 to index
    %c0_110 = arith.constant 0 : index
    %147 = vector.load %arg2[%146, %c0_110] : memref<344x128xf32, #tpu.memory_space<vmem>>, vector<1x128xf32>
    %c6_111 = arith.constant 6 : index
    %c0_112 = arith.constant 0 : index
    %148 = vector.load %arg4[%c6_111, %c0_112] : memref<8x128xf32, #tpu.memory_space<vmem>>, vector<1x128xf32>
    tpu.vector_store %arg4[%c6_111, %c0_112], %147 {strides = array<i32>} : memref<8x128xf32, #tpu.memory_space<vmem>>, vector<1x128xf32>,
    %c7_i32_113 = arith.constant 7 : i32
    %149 = arith.addi %0, %c7_i32_113 : i32
    %c2_114 = arith.constant 2 : index
    %150 = arith.index_cast %149 : i32 to index
    %151 = memref.load %arg1[%c2_114, %150] : memref<4x8xi32, #tpu.memory_space<smem>>
    %152 = arith.index_cast %151 : i32 to index
    %c0_115 = arith.constant 0 : index
    %153 = vector.load %arg2[%152, %c0_115] : memref<344x128xf32, #tpu.memory_space<vmem>>, vector<1x128xf32>
    %c7_116 = arith.constant 7 : index
    %c0_117 = arith.constant 0 : index
    %154 = vector.load %arg4[%c7_116, %c0_117] : memref<8x128xf32, #tpu.memory_space<vmem>>, vector<1x128xf32>
    tpu.vector_store %arg4[%c7_116, %c0_117], %153 {strides = array<i32>} : memref<8x128xf32, #tpu.memory_space<vmem>>, vector<1x128xf32>,
    %c0_118 = arith.constant 0 : index
    %c0_119 = arith.constant 0 : index
    %155 = vector.load %arg3[%c0_118, %c0_119] : memref<8x128xf32, #tpu.memory_space<vmem>>, vector<8x128xf32>
    %c0_120 = arith.constant 0 : index
    %c0_121 = arith.constant 0 : index
    %156 = vector.load %arg4[%c0_120, %c0_121] : memref<8x128xf32, #tpu.memory_space<vmem>>, vector<8x128xf32>
    %157 = arith.addf %155, %156 : vector<8x128xf32>
    %c0_122 = arith.constant 0 : index
    %c0_123 = arith.constant 0 : index
    %158 = vector.load %arg3[%c0_122, %c0_123] : memref<8x128xf32, #tpu.memory_space<vmem>>, vector<8x128xf32>
    tpu.vector_store %arg3[%c0_122, %c0_123], %157 {strides = array<i32>} : memref<8x128xf32, #tpu.memory_space<vmem>>, vector<8x128xf32>,
    %c0_i32_124 = arith.constant 0 : i32
    %159 = arith.addi %0, %c0_i32_124 : i32
    %c3_125 = arith.constant 3 : index
    %160 = arith.index_cast %159 : i32 to index
    %161 = memref.load %arg1[%c3_125, %160] : memref<4x8xi32, #tpu.memory_space<smem>>
    %162 = arith.index_cast %161 : i32 to index
    %c0_126 = arith.constant 0 : index
    %163 = vector.load %arg2[%162, %c0_126] : memref<344x128xf32, #tpu.memory_space<vmem>>, vector<1x128xf32>
    %c0_127 = arith.constant 0 : index
    %c0_128 = arith.constant 0 : index
    %164 = vector.load %arg4[%c0_127, %c0_128] : memref<8x128xf32, #tpu.memory_space<vmem>>, vector<1x128xf32>
    tpu.vector_store %arg4[%c0_127, %c0_128], %163 {strides = array<i32>} : memref<8x128xf32, #tpu.memory_space<vmem>>, vector<1x128xf32>,
    %c1_i32_129 = arith.constant 1 : i32
    %165 = arith.addi %0, %c1_i32_129 : i32
    %c3_130 = arith.constant 3 : index
    %166 = arith.index_cast %165 : i32 to index
    %167 = memref.load %arg1[%c3_130, %166] : memref<4x8xi32, #tpu.memory_space<smem>>
    %168 = arith.index_cast %167 : i32 to index
    %c0_131 = arith.constant 0 : index
    %169 = vector.load %arg2[%168, %c0_131] : memref<344x128xf32, #tpu.memory_space<vmem>>, vector<1x128xf32>
    %c1_132 = arith.constant 1 : index
    %c0_133 = arith.constant 0 : index
    %170 = vector.load %arg4[%c1_132, %c0_133] : memref<8x128xf32, #tpu.memory_space<vmem>>, vector<1x128xf32>
    tpu.vector_store %arg4[%c1_132, %c0_133], %169 {strides = array<i32>} : memref<8x128xf32, #tpu.memory_space<vmem>>, vector<1x128xf32>,
    %c2_i32_134 = arith.constant 2 : i32
    %171 = arith.addi %0, %c2_i32_134 : i32
    %c3_135 = arith.constant 3 : index
    %172 = arith.index_cast %171 : i32 to index
    %173 = memref.load %arg1[%c3_135, %172] : memref<4x8xi32, #tpu.memory_space<smem>>
    %174 = arith.index_cast %173 : i32 to index
    %c0_136 = arith.constant 0 : index
    %175 = vector.load %arg2[%174, %c0_136] : memref<344x128xf32, #tpu.memory_space<vmem>>, vector<1x128xf32>
    %c2_137 = arith.constant 2 : index
    %c0_138 = arith.constant 0 : index
    %176 = vector.load %arg4[%c2_137, %c0_138] : memref<8x128xf32, #tpu.memory_space<vmem>>, vector<1x128xf32>
    tpu.vector_store %arg4[%c2_137, %c0_138], %175 {strides = array<i32>} : memref<8x128xf32, #tpu.memory_space<vmem>>, vector<1x128xf32>,
    %c3_i32_139 = arith.constant 3 : i32
    %177 = arith.addi %0, %c3_i32_139 : i32
    %c3_140 = arith.constant 3 : index
    %178 = arith.index_cast %177 : i32 to index
    %179 = memref.load %arg1[%c3_140, %178] : memref<4x8xi32, #tpu.memory_space<smem>>
    %180 = arith.index_cast %179 : i32 to index
    %c0_141 = arith.constant 0 : index
    %181 = vector.load %arg2[%180, %c0_141] : memref<344x128xf32, #tpu.memory_space<vmem>>, vector<1x128xf32>
    %c3_142 = arith.constant 3 : index
    %c0_143 = arith.constant 0 : index
    %182 = vector.load %arg4[%c3_142, %c0_143] : memref<8x128xf32, #tpu.memory_space<vmem>>, vector<1x128xf32>
    tpu.vector_store %arg4[%c3_142, %c0_143], %181 {strides = array<i32>} : memref<8x128xf32, #tpu.memory_space<vmem>>, vector<1x128xf32>,
    %c4_i32_144 = arith.constant 4 : i32
    %183 = arith.addi %0, %c4_i32_144 : i32
    %c3_145 = arith.constant 3 : index
    %184 = arith.index_cast %183 : i32 to index
    %185 = memref.load %arg1[%c3_145, %184] : memref<4x8xi32, #tpu.memory_space<smem>>
    %186 = arith.index_cast %185 : i32 to index
    %c0_146 = arith.constant 0 : index
    %187 = vector.load %arg2[%186, %c0_146] : memref<344x128xf32, #tpu.memory_space<vmem>>, vector<1x128xf32>
    %c4_147 = arith.constant 4 : index
    %c0_148 = arith.constant 0 : index
    %188 = vector.load %arg4[%c4_147, %c0_148] : memref<8x128xf32, #tpu.memory_space<vmem>>, vector<1x128xf32>
    tpu.vector_store %arg4[%c4_147, %c0_148], %187 {strides = array<i32>} : memref<8x128xf32, #tpu.memory_space<vmem>>, vector<1x128xf32>,
    %c5_i32_149 = arith.constant 5 : i32
    %189 = arith.addi %0, %c5_i32_149 : i32
    %c3_150 = arith.constant 3 : index
    %190 = arith.index_cast %189 : i32 to index
    %191 = memref.load %arg1[%c3_150, %190] : memref<4x8xi32, #tpu.memory_space<smem>>
    %192 = arith.index_cast %191 : i32 to index
    %c0_151 = arith.constant 0 : index
    %193 = vector.load %arg2[%192, %c0_151] : memref<344x128xf32, #tpu.memory_space<vmem>>, vector<1x128xf32>
    %c5_152 = arith.constant 5 : index
    %c0_153 = arith.constant 0 : index
    %194 = vector.load %arg4[%c5_152, %c0_153] : memref<8x128xf32, #tpu.memory_space<vmem>>, vector<1x128xf32>
    tpu.vector_store %arg4[%c5_152, %c0_153], %193 {strides = array<i32>} : memref<8x128xf32, #tpu.memory_space<vmem>>, vector<1x128xf32>,
    %c6_i32_154 = arith.constant 6 : i32
    %195 = arith.addi %0, %c6_i32_154 : i32
    %c3_155 = arith.constant 3 : index
    %196 = arith.index_cast %195 : i32 to index
    %197 = memref.load %arg1[%c3_155, %196] : memref<4x8xi32, #tpu.memory_space<smem>>
    %198 = arith.index_cast %197 : i32 to index
    %c0_156 = arith.constant 0 : index
    %199 = vector.load %arg2[%198, %c0_156] : memref<344x128xf32, #tpu.memory_space<vmem>>, vector<1x128xf32>
    %c6_157 = arith.constant 6 : index
    %c0_158 = arith.constant 0 : index
    %200 = vector.load %arg4[%c6_157, %c0_158] : memref<8x128xf32, #tpu.memory_space<vmem>>, vector<1x128xf32>
    tpu.vector_store %arg4[%c6_157, %c0_158], %199 {strides = array<i32>} : memref<8x128xf32, #tpu.memory_space<vmem>>, vector<1x128xf32>,
    %c7_i32_159 = arith.constant 7 : i32
    %201 = arith.addi %0, %c7_i32_159 : i32
    %c3_160 = arith.constant 3 : index
    %202 = arith.index_cast %201 : i32 to index
    %203 = memref.load %arg1[%c3_160, %202] : memref<4x8xi32, #tpu.memory_space<smem>>
    %204 = arith.index_cast %203 : i32 to index
    %c0_161 = arith.constant 0 : index
    %205 = vector.load %arg2[%204, %c0_161] : memref<344x128xf32, #tpu.memory_space<vmem>>, vector<1x128xf32>
    %c7_162 = arith.constant 7 : index
    %c0_163 = arith.constant 0 : index
    %206 = vector.load %arg4[%c7_162, %c0_163] : memref<8x128xf32, #tpu.memory_space<vmem>>, vector<1x128xf32>
    tpu.vector_store %arg4[%c7_162, %c0_163], %205 {strides = array<i32>} : memref<8x128xf32, #tpu.memory_space<vmem>>, vector<1x128xf32>,
    %c0_164 = arith.constant 0 : index
    %c0_165 = arith.constant 0 : index
    %207 = vector.load %arg3[%c0_164, %c0_165] : memref<8x128xf32, #tpu.memory_space<vmem>>, vector<8x128xf32>
    %c0_166 = arith.constant 0 : index
    %c0_167 = arith.constant 0 : index
    %208 = vector.load %arg4[%c0_166, %c0_167] : memref<8x128xf32, #tpu.memory_space<vmem>>, vector<8x128xf32>
    %209 = arith.addf %207, %208 : vector<8x128xf32>
    %c0_168 = arith.constant 0 : index
    %c0_169 = arith.constant 0 : index
    %210 = vector.load %arg3[%c0_168, %c0_169] : memref<8x128xf32, #tpu.memory_space<vmem>>, vector<8x128xf32>
    tpu.vector_store %arg3[%c0_168, %c0_169], %209 {strides = array<i32>} : memref<8x128xf32, #tpu.memory_space<vmem>>, vector<8x128xf32>,
    return
  }
  func.func @transform_0(%arg0: i32, %arg1: memref<4x8xi32, #tpu.memory_space<smem>>) -> (i32, i32) {
    %c0_i32 = arith.constant 0 : i32
    %c0_i32_0 = arith.constant 0 : i32
    %c0_i32_1 = arith.constant 0 : i32
    return %c0_i32, %c0_i32_0 : i32, i32
  }
  func.func @transform_1(%arg0: i32, %arg1: memref<4x8xi32, #tpu.memory_space<smem>>) -> (i32, i32) {
    %c0_i32 = arith.constant 0 : i32
    %c0_i32_0 = arith.constant 0 : i32
    return %arg0, %c0_i32 : i32, i32
  }
}

</mosaic_0001>

<llo_original>
// kernel: tpu_custom_call.1
$region0: #{tpu_custom_call.1}
  #allocation0 [shape = 'u32[]', space=smem, size = 0x4, offset = 0x4, fixed_abs, tag = 'smem constant byte address 0x4 - core index']
  #allocation1 [shape = 'u32[72,128]{1,0:T(1,128)}', space=vmem, size = 0x9000, scoped, tag = 'internal scratch']
  #allocation2 [shape = 'f32[8,128]{1,0:T(8,128)}', space=vmem, size = 0x1000, scoped, tag = 'scratch operand']
  #allocation3 [shape = 's32[1]{0}', space=sflag, size = 0x4, scoped, tag = 'scoped memory for tpu_custom_call.1']
  #allocation4 [shape = 'u8[2048]{0}', space=smem, size = 0x800, scoped, tag = 'prefetched SMEM operand 0']
  %s0 = inlined_call_operand.hbm [shape: s32[4,8], index: 0, kind: input, shape index: {}]
  %s1 = inlined_call_operand.hbm [shape: f32[344,128], index: 1, kind: input, shape index: {}]
  %s2 = inlined_call_operand.hbm [shape: f32[8,128], index: 2, kind: output, shape index: {}]
  %s3 = sld [smem:[#allocation0]]
  $region18: #{tpu_custom_call.1} parent=0
    _
  %s5 = ssub.s32 1, %s3
  %s6 = scalar_select 0, %s5, %s3
  %s8 = sshll.u32 %s0, 4
  %s9 = int_to_ptr.hbm [resolvable:$true] %s8
  %11 = dma.hbm_to_smem %s9, 64, [#allocation4], [#allocation3]
  %13 = dma.done [#allocation3], 64
  %14 = sfence
  $region1: #{tpu_custom_call.1} parent=0
    #allocation5 [shape = 'u8[176128]{0}', space=vmem, size = 0x2b000, scoped, tag = 'input window, operand 1, single buffered']
    #allocation6 [shape = 's32[1]{0}', space=sflag, size = 0x4, scoped, tag = 'scoped memory for tpu_custom_call.1']
    #allocation7 [shape = 's32[1]{0}', space=sflag, size = 0x4, scoped, tag = 'scoped memory for tpu_custom_call.1']
    #allocation8 [shape = 'u8[4096]{0}', space=vmem, size = 0x1000, scoped, tag = 'output window, operand 0, single buffered']
    %15 = vsyncpa [#allocation6], 0
    %16 = vsyncpa [#allocation7], 0
    // Predicated region
    $region2: #{tpu_custom_call.1} parent=1 // pred_check
      _
    $region3: #{tpu_custom_call.1} parent=1 // pred_check_branch
      %18 = sbr.rel (0) target = $region5
    $region4: #{tpu_custom_call.1} parent=1 // pred_region
      %20 = vsyncadd [#allocation6], 0
      %s21 = sshll.u32 %s1, 4
      %s22 = int_to_ptr.hbm [resolvable:$true] %s21
      %s23 = sshll.u32 [#allocation5], 4
      %s24 = int_to_ptr.vmem [resolvable:$true] %s23
      %29 = dma.hbm_to_vmem [thread:$0]  %s22, 5504, %s24, [#allocation6], 128, 128, 8
    $region5: #{tpu_custom_call.1} parent=1 // pred_fallthru
      _
    // Predicated region
    $region6: #{tpu_custom_call.1} parent=1 // pred_check
      _
    $region7: #{tpu_custom_call.1} parent=1 // pred_check_branch
      %31 = sbr.rel (0) target = $region9
    $region8: #{tpu_custom_call.1} parent=1 // pred_region
      %33 = dma.done [#allocation6], 5504
    $region9: #{tpu_custom_call.1} parent=1 // pred_fallthru
      _
    %s34 = smul.u32 0, 8
    %35 = vst [vmem:[#allocation8] sm:$0xff] 0.0
    %s36 = sld [smem:[#allocation4 + %s34]]
    %s37 = scalar_lea.vmem [#allocation5], %s36
    %v38 = vld [vmem:[%s37] sm:$0x1]
    %39 = vst [vmem:[#allocation2] sm:$0x1] %v38
    %s40 = sadd.s32 %s34, 1
    %s41 = sld [smem:[#allocation4 + %s40]]
    %s42 = scalar_lea.vmem [#allocation5], %s41
    %v43 = vld [vmem:[%s42] sm:$0x1]
    %44 = vst [vmem:[#allocation2 + $0x1] sm:$0x1] %v43
    %s45 = sadd.s32 %s34, 2
    %s46 = sld [smem:[#allocation4 + %s45]]
    %s47 = scalar_lea.vmem [#allocation5], %s46
    %v48 = vld [vmem:[%s47] sm:$0x1]
    %49 = vst [vmem:[#allocation2 + $0x2] sm:$0x1] %v48
    %s50 = sadd.s32 %s34, 3
    %s51 = sld [smem:[#allocation4 + %s50]]
    %s52 = scalar_lea.vmem [#allocation5], %s51
    %v53 = vld [vmem:[%s52] sm:$0x1]
    %54 = vst [vmem:[#allocation2 + $0x3] sm:$0x1] %v53
    %s55 = sadd.s32 %s34, 4
    %s56 = sld [smem:[#allocation4 + %s55]]
    %s57 = scalar_lea.vmem [#allocation5], %s56
    %v58 = vld [vmem:[%s57] sm:$0x1]
    %59 = vst [vmem:[#allocation2 + $0x4] sm:$0x1] %v58
    %s60 = sadd.s32 %s34, 5
    %s61 = sld [smem:[#allocation4 + %s60]]
    %s62 = scalar_lea.vmem [#allocation5], %s61
    %v63 = vld [vmem:[%s62] sm:$0x1]
    %64 = vst [vmem:[#allocation2 + $0x5] sm:$0x1] %v63
    %s65 = sadd.s32 %s34, 6
    %s66 = sld [smem:[#allocation4 + %s65]]
    %s67 = scalar_lea.vmem [#allocation5], %s66
    %v68 = vld [vmem:[%s67] sm:$0x1]
    %69 = vst [vmem:[#allocation2 + $0x6] sm:$0x1] %v68
    %s70 = sadd.s32 %s34, 7
    %s71 = sld [smem:[#allocation4 + %s70]]
    %s72 = scalar_lea.vmem [#allocation5], %s71
    %v73 = vld [vmem:[%s72] sm:$0x1]
    %74 = vst [vmem:[#allocation2 + $0x7] sm:$0x1] %v73
    %v75 = vld [vmem:[#allocation8] sm:$0xff]
    %v76 = vld [vmem:[#allocation2] sm:$0xff]
    %v77 = vadd.f32 %v75, %v76
    %78 = vst [vmem:[#allocation8] sm:$0xff] %v77
    %s79 = sshra.s32 %s34, 7
    %s80 = sand.u32 %s34, 127
    %s81 = sadd.s32 %s79, 1
    %s82 = smul.u32 %s81, 128
    %s83 = sshra.s32 %s34, 7
    %s84 = sand.u32 %s34, 127
    %s85 = sadd.s32 %s82, %s84
    %s86 = sld [smem:[#allocation4 + %s85]]
    %s87 = scalar_lea.vmem [#allocation5], %s86
    %v88 = vld [vmem:[%s87] sm:$0x1]
    %89 = vst [vmem:[#allocation2] sm:$0x1] %v88
    %s90 = sshra.s32 %s40, 7
    %s91 = sand.u32 %s40, 127
    %s92 = sadd.s32 %s90, 1
    %s93 = smul.u32 %s92, 128
    %s94 = sshra.s32 %s40, 7
    %s95 = sand.u32 %s40, 127
    %s96 = sadd.s32 %s93, %s95
    %s97 = sld [smem:[#allocation4 + %s96]]
    %s98 = scalar_lea.vmem [#allocation5], %s97
    %v99 = vld [vmem:[%s98] sm:$0x1]
    %100 = vst [vmem:[#allocation2 + $0x1] sm:$0x1] %v99
    %s101 = sshra.s32 %s45, 7
    %s102 = sand.u32 %s45, 127
    %s103 = sadd.s32 %s101, 1
    %s104 = smul.u32 %s103, 128
    %s105 = sshra.s32 %s45, 7
    %s106 = sand.u32 %s45, 127
    %s107 = sadd.s32 %s104, %s106
    %s108 = sld [smem:[#allocation4 + %s107]]
    %s109 = scalar_lea.vmem [#allocation5], %s108
    %v110 = vld [vmem:[%s109] sm:$0x1]
    %111 = vst [vmem:[#allocation2 + $0x2] sm:$0x1] %v110
    %s112 = sshra.s32 %s50, 7
    %s113 = sand.u32 %s50, 127
    %s114 = sadd.s32 %s112, 1
    %s115 = smul.u32 %s114, 128
    %s116 = sshra.s32 %s50, 7
    %s117 = sand.u32 %s50, 127
    %s118 = sadd.s32 %s115, %s117
    %s119 = sld [smem:[#allocation4 + %s118]]
    %s120 = scalar_lea.vmem [#allocation5], %s119
    %v121 = vld [vmem:[%s120] sm:$0x1]
    %122 = vst [vmem:[#allocation2 + $0x3] sm:$0x1] %v121
    %s123 = sshra.s32 %s55, 7
    %s124 = sand.u32 %s55, 127
    %s125 = sadd.s32 %s123, 1
    %s126 = smul.u32 %s125, 128
    %s127 = sshra.s32 %s55, 7
    %s128 = sand.u32 %s55, 127
    %s129 = sadd.s32 %s126, %s128
    %s130 = sld [smem:[#allocation4 + %s129]]
    %s131 = scalar_lea.vmem [#allocation5], %s130
    %v132 = vld [vmem:[%s131] sm:$0x1]
    %133 = vst [vmem:[#allocation2 + $0x4] sm:$0x1] %v132
    %s134 = sshra.s32 %s60, 7
    %s135 = sand.u32 %s60, 127
    %s136 = sadd.s32 %s134, 1
    %s137 = smul.u32 %s136, 128
    %s138 = sshra.s32 %s60, 7
    %s139 = sand.u32 %s60, 127
    %s140 = sadd.s32 %s137, %s139
    %s141 = sld [smem:[#allocation4 + %s140]]
    %s142 = scalar_lea.vmem [#allocation5], %s141
    %v143 = vld [vmem:[%s142] sm:$0x1]
    %144 = vst [vmem:[#allocation2 + $0x5] sm:$0x1] %v143
    %s145 = sshra.s32 %s65, 7
    %s146 = sand.u32 %s65, 127
    %s147 = sadd.s32 %s145, 1
    %s148 = smul.u32 %s147, 128
    %s149 = sshra.s32 %s65, 7
    %s150 = sand.u32 %s65, 127
    %s151 = sadd.s32 %s148, %s150
    %s152 = sld [smem:[#allocation4 + %s151]]
    %s153 = scalar_lea.vmem [#allocation5], %s152
    %v154 = vld [vmem:[%s153] sm:$0x1]
    %155 = vst [vmem:[#allocation2 + $0x6] sm:$0x1] %v154
    %s156 = sshra.s32 %s70, 7
    %s157 = sand.u32 %s70, 127
    %s158 = sadd.s32 %s156, 1
    %s159 = smul.u32 %s158, 128
    %s160 = sshra.s32 %s70, 7
    %s161 = sand.u32 %s70, 127
    %s162 = sadd.s32 %s159, %s161
    %s163 = sld [smem:[#allocation4 + %s162]]
    %s164 = scalar_lea.vmem [#allocation5], %s163
    %v165 = vld [vmem:[%s164] sm:$0x1]
    %166 = vst [vmem:[#allocation2 + $0x7] sm:$0x1] %v165
    %v167 = vld [vmem:[#allocation8] sm:$0xff]
    %v168 = vld [vmem:[#allocation2] sm:$0xff]
    %v169 = vadd.f32 %v167, %v168
    %170 = vst [vmem:[#allocation8] sm:$0xff] %v169
    %s171 = sadd.s32 %s79, 2
    %s172 = smul.u32 %s171, 128
    %s173 = sadd.s32 %s172, %s84
    %s174 = sld [smem:[#allocation4 + %s173]]
    %s175 = scalar_lea.vmem [#allocation5], %s174
    %v176 = vld [vmem:[%s175] sm:$0x1]
    %177 = vst [vmem:[#allocation2] sm:$0x1] %v176
    %s178 = sadd.s32 %s90, 2
    %s179 = smul.u32 %s178, 128
    %s180 = sadd.s32 %s179, %s95
    %s181 = sld [smem:[#allocation4 + %s180]]
    %s182 = scalar_lea.vmem [#allocation5], %s181
    %v183 = vld [vmem:[%s182] sm:$0x1]
    %184 = vst [vmem:[#allocation2 + $0x1] sm:$0x1] %v183
    %s185 = sadd.s32 %s101, 2
    %s186 = smul.u32 %s185, 128
    %s187 = sadd.s32 %s186, %s106
    %s188 = sld [smem:[#allocation4 + %s187]]
    %s189 = scalar_lea.vmem [#allocation5], %s188
    %v190 = vld [vmem:[%s189] sm:$0x1]
    %191 = vst [vmem:[#allocation2 + $0x2] sm:$0x1] %v190
    %s192 = sadd.s32 %s112, 2
    %s193 = smul.u32 %s192, 128
    %s194 = sadd.s32 %s193, %s117
    %s195 = sld [smem:[#allocation4 + %s194]]
    %s196 = scalar_lea.vmem [#allocation5], %s195
    %v197 = vld [vmem:[%s196] sm:$0x1]
    %198 = vst [vmem:[#allocation2 + $0x3] sm:$0x1] %v197
    %s199 = sadd.s32 %s123, 2
    %s200 = smul.u32 %s199, 128
    %s201 = sadd.s32 %s200, %s128
    %s202 = sld [smem:[#allocation4 + %s201]]
    %s203 = scalar_lea.vmem [#allocation5], %s202
    %v204 = vld [vmem:[%s203] sm:$0x1]
    %205 = vst [vmem:[#allocation2 + $0x4] sm:$0x1] %v204
    %s206 = sadd.s32 %s134, 2
    %s207 = smul.u32 %s206, 128
    %s208 = sadd.s32 %s207, %s139
    %s209 = sld [smem:[#allocation4 + %s208]]
    %s210 = scalar_lea.vmem [#allocation5], %s209
    %v211 = vld [vmem:[%s210] sm:$0x1]
    %212 = vst [vmem:[#allocation2 + $0x5] sm:$0x1] %v211
    %s213 = sadd.s32 %s145, 2
    %s214 = smul.u32 %s213, 128
    %s215 = sadd.s32 %s214, %s150
    %s216 = sld [smem:[#allocation4 + %s215]]
    %s217 = scalar_lea.vmem [#allocation5], %s216
    %v218 = vld [vmem:[%s217] sm:$0x1]
    %219 = vst [vmem:[#allocation2 + $0x6] sm:$0x1] %v218
    %s220 = sadd.s32 %s156, 2
    %s221 = smul.u32 %s220, 128
    %s222 = sadd.s32 %s221, %s161
    %s223 = sld [smem:[#allocation4 + %s222]]
    %s224 = scalar_lea.vmem [#allocation5], %s223
    %v225 = vld [vmem:[%s224] sm:$0x1]
    %226 = vst [vmem:[#allocation2 + $0x7] sm:$0x1] %v225
    %v227 = vld [vmem:[#allocation8] sm:$0xff]
    %v228 = vld [vmem:[#allocation2] sm:$0xff]
    %v229 = vadd.f32 %v227, %v228
    %230 = vst [vmem:[#allocation8] sm:$0xff] %v229
    %s231 = sadd.s32 %s79, 3
    %s232 = smul.u32 %s231, 128
    %s233 = sadd.s32 %s232, %s84
    %s234 = sld [smem:[#allocation4 + %s233]]
    %s235 = scalar_lea.vmem [#allocation5], %s234
    %v236 = vld [vmem:[%s235] sm:$0x1]
    %237 = vst [vmem:[#allocation2] sm:$0x1] %v236
    %s238 = sadd.s32 %s90, 3
    %s239 = smul.u32 %s238, 128
    %s240 = sadd.s32 %s239, %s95
    %s241 = sld [smem:[#allocation4 + %s240]]
    %s242 = scalar_lea.vmem [#allocation5], %s241
    %v243 = vld [vmem:[%s242] sm:$0x1]
    %244 = vst [vmem:[#allocation2 + $0x1] sm:$0x1] %v243
    %s245 = sadd.s32 %s101, 3
    %s246 = smul.u32 %s245, 128
    %s247 = sadd.s32 %s246, %s106
    %s248 = sld [smem:[#allocation4 + %s247]]
    %s249 = scalar_lea.vmem [#allocation5], %s248
    %v250 = vld [vmem:[%s249] sm:$0x1]
    %251 = vst [vmem:[#allocation2 + $0x2] sm:$0x1] %v250
    %s252 = sadd.s32 %s112, 3
    %s253 = smul.u32 %s252, 128
    %s254 = sadd.s32 %s253, %s117
    %s255 = sld [smem:[#allocation4 + %s254]]
    %s256 = scalar_lea.vmem [#allocation5], %s255
    %v257 = vld [vmem:[%s256] sm:$0x1]
    %258 = vst [vmem:[#allocation2 + $0x3] sm:$0x1] %v257
    %s259 = sadd.s32 %s123, 3
    %s260 = smul.u32 %s259, 128
    %s261 = sadd.s32 %s260, %s128
    %s262 = sld [smem:[#allocation4 + %s261]]
    %s263 = scalar_lea.vmem [#allocation5], %s262
    %v264 = vld [vmem:[%s263] sm:$0x1]
    %265 = vst [vmem:[#allocation2 + $0x4] sm:$0x1] %v264
    %s266 = sadd.s32 %s134, 3
    %s267 = smul.u32 %s266, 128
    %s268 = sadd.s32 %s267, %s139
    %s269 = sld [smem:[#allocation4 + %s268]]
    %s270 = scalar_lea.vmem [#allocation5], %s269
    %v271 = vld [vmem:[%s270] sm:$0x1]
    %272 = vst [vmem:[#allocation2 + $0x5] sm:$0x1] %v271
    %s273 = sadd.s32 %s145, 3
    %s274 = smul.u32 %s273, 128
    %s275 = sadd.s32 %s274, %s150
    %s276 = sld [smem:[#allocation4 + %s275]]
    %s277 = scalar_lea.vmem [#allocation5], %s276
    %v278 = vld [vmem:[%s277] sm:$0x1]
    %279 = vst [vmem:[#allocation2 + $0x6] sm:$0x1] %v278
    %s280 = sadd.s32 %s156, 3
    %s281 = smul.u32 %s280, 128
    %s282 = sadd.s32 %s281, %s161
    %s283 = sld [smem:[#allocation4 + %s282]]
    %s284 = scalar_lea.vmem [#allocation5], %s283
    %v285 = vld [vmem:[%s284] sm:$0x1]
    %286 = vst [vmem:[#allocation2 + $0x7] sm:$0x1] %v285
    %v287 = vld [vmem:[#allocation8] sm:$0xff]
    %v288 = vld [vmem:[#allocation2] sm:$0xff]
    %v289 = vadd.f32 %v287, %v288
    %290 = vst [vmem:[#allocation8] sm:$0xff] %v289
    // Predicated region
    $region10: #{tpu_custom_call.1} parent=1 // pred_check
      _
    $region11: #{tpu_custom_call.1} parent=1 // pred_check_branch
      %292 = sbr.rel (0) target = $region13
    $region12: #{tpu_custom_call.1} parent=1 // pred_region
      %294 = vsyncadd [#allocation7], 0
      %s296 = sshll.u32 [#allocation8], 4
      %s297 = int_to_ptr.vmem [resolvable:$true] %s296
      %s298 = sshll.u32 %s2, 4
      %s299 = int_to_ptr.hbm [resolvable:$true] %s298
      %301 = dma.vmem_to_hbm [thread:$0]  %s297, 128, %s299, [#allocation7]
    $region13: #{tpu_custom_call.1} parent=1 // pred_fallthru
      _
    // Predicated region
    $region14: #{tpu_custom_call.1} parent=1 // pred_check
      _
    $region15: #{tpu_custom_call.1} parent=1 // pred_check_branch
      %303 = sbr.rel (0) target = $region17
    $region16: #{tpu_custom_call.1} parent=1 // pred_region
      %305 = dma.done [#allocation7], 128
    $region17: #{tpu_custom_call.1} parent=1 // pred_fallthru
      _
    %306 = vsyncpa [#allocation6], 1
    %307 = vsyncpa [#allocation7], 1

</llo_original>
